<compile_context>
chip_gen: v7x
topology: tpu7x:2x2x1
jax: 0.10.0
libtpu: 0.0.40
codegen_flags: <defaults>
</compile_context>

<pallas_src>
import functools

import jax
import jax.numpy as jnp
from jax.experimental import pallas as pl
from jax.experimental.pallas import tpu as pltpu


def _round_up(x: int, m: int) -> int:
    return ((x + m - 1) // m) * m


# ----------------------------- kernels ------------------------------------ #


def _kernel_single_k(x_ref, w_ref, wn_ref, xn_ref, cos_ref, *, eps: float):
    """Full K resident in VMEM: no accumulator needed. Grid = (M, N)."""
    x = x_ref[...]                                                  # (tm, K) f32
    inner = jnp.dot(x, w_ref[...],
                    preferred_element_type=jnp.float32)             # MXU (tm, tn)
    x_norm = jnp.sqrt(jnp.sum(x * x, axis=-1, keepdims=True))       # (tm, 1)
    denom = jnp.maximum(x_norm * wn_ref[...], jnp.float32(eps))     # (tm, tn)
    cos_ref[...] = (inner / denom).astype(cos_ref.dtype)
    xn_ref[...] = x_norm.astype(xn_ref.dtype)


def _kernel_tiled_k(x_ref, w_ref, wn_ref, xn_ref, cos_ref,
                    acc_ref, ssq_ref, *, eps: float):
    """K tiled: accumulate inner product AND sum(x*x) across K. Grid = (M, N, K)."""
    k = pl.program_id(2)

    @pl.when(k == 0)
    def _():
        acc_ref[...] = jnp.zeros_like(acc_ref)
        ssq_ref[...] = jnp.zeros_like(ssq_ref)

    x = x_ref[...]                                                  # (tm, tk)
    acc_ref[...] += jnp.dot(x, w_ref[...],
                            preferred_element_type=jnp.float32)     # MXU
    ssq_ref[...] += jnp.sum(x * x, axis=-1, keepdims=True)          # (tm, 1)

    @pl.when(k == pl.num_programs(2) - 1)
    def _():
        x_norm = jnp.sqrt(ssq_ref[...])
        denom = jnp.maximum(x_norm * wn_ref[...], jnp.float32(eps))
        cos_ref[...] = (acc_ref[...] / denom).astype(cos_ref.dtype)
        xn_ref[...] = x_norm.astype(xn_ref.dtype)


# ----------------------------- wrapper ------------------------------------ #


def spherical_linear(x: jax.Array, weights: jax.Array, eps: float = 1e-8,
                     *, tm: int = 256, tn: int = 256, tk: int = 512) -> jax.Array:
    """Pallas equivalent of SphericalLinear.forward(x)."""
    batch, in_f = x.shape
    in_f_w, out_f = weights.shape
    assert in_f == in_f_w, "in_features mismatch"

    out_dtype = x.dtype
    xf = x.astype(jnp.float32)
    wf = weights.astype(jnp.float32)

    # Hoisted once: per-column norms of W (tiny XLA reduce), streamed to the
    # kernel tiled along N so it is never recomputed per grid step.
    w_norm = jnp.sqrt(jnp.sum(wf * wf, axis=0, keepdims=True))      # (1, out_f)

    # Tile sizes (clamped for small problems; always (8,128)-aligned).
    tm = min(tm, _round_up(batch, 8))
    tn = min(tn, _round_up(out_f, 128))
    m_pad = _round_up(batch, tm)
    n_pad = _round_up(out_f, tn)

    k_tiled = in_f > tk
    k_pad = _round_up(in_f, tk) if k_tiled else max(in_f, 1)

    # Zero padding is semantics-preserving: padded rows/cols contribute 0 to
    # inner products and norms; padded w_norm columns give denom=eps, cos=0;
    # everything padded is sliced away below.  Only pad when needed.
    xp = xf if (m_pad == batch and k_pad == in_f) else jnp.pad(
        xf, ((0, m_pad - batch), (0, k_pad - in_f)))
    wp = wf if (k_pad == in_f and n_pad == out_f) else jnp.pad(
        wf, ((0, k_pad - in_f), (0, n_pad - out_f)))
    wnp = w_norm if n_pad == out_f else jnp.pad(
        w_norm, ((0, 0), (0, n_pad - out_f)))

    out_shapes = (
        jax.ShapeDtypeStruct((m_pad, 1), jnp.float32),      # x_norm
        jax.ShapeDtypeStruct((m_pad, n_pad), jnp.float32),  # cosine (lane-dense)
    )

    if not k_tiled:
        grid = (m_pad // tm, n_pad // tn)
        kernel = functools.partial(_kernel_single_k, eps=eps)
        in_specs = [
            pl.BlockSpec((tm, k_pad), lambda i, j: (i, 0)),
            pl.BlockSpec((k_pad, tn), lambda i, j: (0, j)),
            pl.BlockSpec((1, tn), lambda i, j: (0, j)),
        ]
        out_specs = (
            pl.BlockSpec((tm, 1), lambda i, j: (i, 0)),
            pl.BlockSpec((tm, tn), lambda i, j: (i, j)),
        )
        scratch_shapes = ()
        # x_norm output block is j-invariant (resident across N) -> keep the
        # N axis "arbitrary"; M axis is parallel for megacore sharding.
        dim_sem = ("parallel", "arbitrary")
    else:
        grid = (m_pad // tm, n_pad // tn, k_pad // tk)
        kernel = functools.partial(_kernel_tiled_k, eps=eps)
        in_specs = [
            pl.BlockSpec((tm, tk), lambda i, j, k: (i, k)),
            pl.BlockSpec((tk, tn), lambda i, j, k: (k, j)),
            pl.BlockSpec((1, tn), lambda i, j, k: (0, j)),
        ]
        out_specs = (
            pl.BlockSpec((tm, 1), lambda i, j, k: (i, 0)),
            pl.BlockSpec((tm, tn), lambda i, j, k: (i, j)),
        )
        scratch_shapes = (
            pltpu.VMEM((tm, tn), jnp.float32),   # matmul accumulator
            pltpu.VMEM((tm, 1), jnp.float32),    # sum(x*x) accumulator
        )
        dim_sem = ("parallel", "arbitrary", "arbitrary")

    xn_pad, cos_pad = pl.pallas_call(
        kernel,
        out_shape=out_shapes,
        grid_spec=pltpu.PrefetchScalarGridSpec(
            num_scalar_prefetch=0,
            grid=grid,
            in_specs=in_specs,
            out_specs=out_specs,
            scratch_shapes=scratch_shapes,
        ),
        compiler_params=pltpu.CompilerParams(
            dimension_semantics=dim_sem,
            vmem_limit_bytes=32 * 1024 * 1024,
        ),
    )(xp, wp, wnp)

    xn = xn_pad[:batch, :]
    cos = cos_pad[:batch, :out_f]
    # torch.hstack([x_norm, cosine_similarity]) as cheap XLA layout plumbing.
    return jnp.concatenate([xn, cos], axis=-1).astype(out_dtype)


# ----------------------------- reference / test ---------------------------- #


def _reference(x, weights, eps=1e-8):
    inner = x @ weights
    w_norm = jnp.linalg.norm(weights, axis=0, keepdims=True)
    x_norm = jnp.linalg.norm(x, axis=-1, keepdims=True)
    denom = jnp.maximum(x_norm * w_norm, eps)
    return jnp.concatenate([x_norm, inner / denom], axis=-1)


if __name__ == "__main__":
    key = jax.random.PRNGKey(0)
    k_x, k_w, k_x2, k_w2 = jax.random.split(key, 4)

    # Case 1: small problem -> single-K path (no K grid axis, no accumulator).
    batch, in_features, out_features = 8, 32, 16
    x = jax.random.normal(k_x, (batch, in_features), dtype=jnp.float32)
    weights = jax.random.normal(k_w, (in_features, out_features), dtype=jnp.float32)

    out = jax.block_until_ready(spherical_linear(x, weights))
    ref = _reference(x, weights)
    assert out.shape == (batch, out_features + 1), out.shape
    assert jnp.allclose(out, ref, atol=1e-5, rtol=1e-5), "mismatch vs reference (single-K)"

    # Case 2: force the K-tiled accumulator path (in_features > tk).
    batch2, in_f2, out_f2 = 16, 256, 48
    x2 = jax.random.normal(k_x2, (batch2, in_f2), dtype=jnp.float32)
    w2 = jax.random.normal(k_w2, (in_f2, out_f2), dtype=jnp.float32)

    out2 = jax.block_until_ready(spherical_linear(x2, w2, tk=128))
    ref2 = _reference(x2, w2)
    assert out2.shape == (batch2, out_f2 + 1), out2.shape
    assert jnp.allclose(out2, ref2, atol=1e-5, rtol=1e-5), "mismatch vs reference (tiled-K)"

    print("KERNEL_OK")
</pallas_src>

<mosaic_0001>
module attributes {stable_mosaic.version = 11 : i64} {
  func.func @_kernel_single_k(%arg0: i32, %arg1: i32, %arg2: memref<8x32xf32, #tpu.memory_space<vmem>>, %arg3: memref<32x128xf32, #tpu.memory_space<vmem>>, %arg4: memref<1x128xf32, #tpu.memory_space<vmem>>, %arg5: memref<8x1xf32, #tpu.memory_space<vmem>>, %arg6: memref<8x128xf32, #tpu.memory_space<vmem>>) attributes {dimension_semantics = [#tpu.dimension_semantics<parallel>, #tpu.dimension_semantics<arbitrary>], iteration_bounds = array<i64: 1, 1>, scalar_prefetch = 0 : i64, scratch_operands = 0 : i64, tpu.core_type = #tpu.core_type<tc>, window_params = [{transform_indices = @transform_0, window_bounds = array<i64: 8, 32>}, {transform_indices = @transform_1, window_bounds = array<i64: 32, 128>}, {transform_indices = @transform_2, window_bounds = array<i64: 1, 128>}, {transform_indices = @transform_3, window_bounds = array<i64: 8, 1>}, {transform_indices = @transform_4, window_bounds = array<i64: 8, 128>}]} {
    %c0 = arith.constant 0 : index
    %c0_0 = arith.constant 0 : index
    %0 = vector.load %arg2[%c0, %c0_0] : memref<8x32xf32, #tpu.memory_space<vmem>>, vector<8x32xf32>
    %c0_1 = arith.constant 0 : index
    %c0_2 = arith.constant 0 : index
    %1 = vector.load %arg3[%c0_1, %c0_2] : memref<32x128xf32, #tpu.memory_space<vmem>>, vector<32x128xf32>
    %cst = arith.constant dense<0.000000e+00> : vector<8x128xf32>
    %2 = tpu.matmul %0, %1, %cst {dimension_numbers = #tpu.dot_dimension_numbers<[1], [0], [0], [1], [0, 0, 1, 1], [], []>} : vector<8x32xf32>, vector<32x128xf32>, vector<8x128xf32> -> vector<8x128xf32>
    %3 = arith.mulf %0, %0 : vector<8x32xf32>
    %cst_3 = arith.constant dense<0.000000e+00> : vector<8xf32>
    %4 = vector.multi_reduction <add>, %3, %cst_3 [1] : vector<8x32xf32> to vector<8xf32>
    %5 = vector.shape_cast %4 : vector<8xf32> to vector<8x1xf32>
    %6 = math.sqrt %5 : vector<8x1xf32>
    %c0_4 = arith.constant 0 : index
    %c0_5 = arith.constant 0 : index
    %7 = vector.load %arg4[%c0_4, %c0_5] : memref<1x128xf32, #tpu.memory_space<vmem>>, vector<1x128xf32>
    %8 = vector.broadcast %6 : vector<8x1xf32> to vector<8x128xf32>
    %9 = vector.broadcast %7 : vector<1x128xf32> to vector<8x128xf32>
    %10 = arith.mulf %8, %9 : vector<8x128xf32>
    %cst_6 = arith.constant 9.99999993E-9 : f32
    %11 = vector.broadcast %cst_6 : f32 to vector<8x128xf32>
    %12 = arith.maximumf %10, %11 : vector<8x128xf32>
    %13 = arith.divf %2, %12 : vector<8x128xf32>
    %c0_7 = arith.constant 0 : index
    %c0_8 = arith.constant 0 : index
    %14 = vector.load %arg6[%c0_7, %c0_8] : memref<8x128xf32, #tpu.memory_space<vmem>>, vector<8x128xf32>
    tpu.vector_store %arg6[%c0_7, %c0_8], %13 {strides = array<i32>} : memref<8x128xf32, #tpu.memory_space<vmem>>, vector<8x128xf32>,
    %c0_9 = arith.constant 0 : index
    %c0_10 = arith.constant 0 : index
    %15 = vector.load %arg5[%c0_9, %c0_10] : memref<8x1xf32, #tpu.memory_space<vmem>>, vector<8x1xf32>
    tpu.vector_store %arg5[%c0_9, %c0_10], %6 {strides = array<i32>} : memref<8x1xf32, #tpu.memory_space<vmem>>, vector<8x1xf32>,
    return
  }
  func.func @transform_0(%arg0: i32, %arg1: i32) -> (i32, i32) {
    %c0_i32 = arith.constant 0 : i32
    %c0_i32_0 = arith.constant 0 : i32
    return %arg0, %c0_i32 : i32, i32
  }
  func.func @transform_1(%arg0: i32, %arg1: i32) -> (i32, i32) {
    %c0_i32 = arith.constant 0 : i32
    %c0_i32_0 = arith.constant 0 : i32
    return %c0_i32, %arg1 : i32, i32
  }
  func.func @transform_2(%arg0: i32, %arg1: i32) -> (i32, i32) {
    %c0_i32 = arith.constant 0 : i32
    %c0_i32_0 = arith.constant 0 : i32
    return %c0_i32, %arg1 : i32, i32
  }
  func.func @transform_3(%arg0: i32, %arg1: i32) -> (i32, i32) {
    %c0_i32 = arith.constant 0 : i32
    %c0_i32_0 = arith.constant 0 : i32
    return %arg0, %c0_i32 : i32, i32
  }
  func.func @transform_4(%arg0: i32, %arg1: i32) -> (i32, i32) {
    %c0_i32 = arith.constant 0 : i32
    return %arg0, %arg1 : i32, i32
  }
}

</mosaic_0001>

<llo_original>
// kernel: tpu_custom_call.1
$region0: #{tpu_custom_call.1}
  #allocation0 [shape = 'u32[]', space=smem, size = 0x4, offset = 0x4, fixed_abs, tag = 'smem constant byte address 0x4 - core index']
  #allocation1 [shape = 'u32[144,128]{1,0:T(1,128)}', space=vmem, size = 0x12000, scoped, tag = 'internal scratch']
  %s0 = inlined_call_operand.hbm [shape: f32[8,32], index: 0, kind: input, shape index: {}]
  %s1 = inlined_call_operand.hbm [shape: f32[32,128], index: 1, kind: input, shape index: {}]
  %s2 = inlined_call_operand.vmem [shape: f32[1,128], index: 2, kind: input, shape index: {}]
  %s3 = inlined_call_operand.vmem [shape: f32[8,1], index: 3, kind: output, shape index: {0}]
  %s4 = inlined_call_operand.hbm [shape: f32[8,128], index: 4, kind: output, shape index: {1}]
  %5 = xla_tuple %s3, %s4
  %s6 = sld [smem:[#allocation0]]
  $region38: #{tpu_custom_call.1} parent=0
    _
  %s8 = ssub.s32 1, %s6
  %s9 = scalar_select 0, %s8, %s6
  $region1: #{tpu_custom_call.1} parent=0
    #allocation2 [shape = 'u8[4096]{0}', space=vmem, size = 0x1000, scoped, tag = 'input window, operand 0, single buffered']
    #allocation3 [shape = 's32[1]{0}', space=sflag, size = 0x4, scoped, tag = 'scoped memory for tpu_custom_call.1']
    #allocation4 [shape = 's32[1]{0}', space=sflag, size = 0x4, scoped, tag = 'scoped memory for tpu_custom_call.1']
    #allocation5 [shape = 'u8[16384]{0}', space=vmem, size = 0x4000, scoped, tag = 'input window, operand 1, single buffered']
    #allocation6 [shape = 's32[1]{0}', space=sflag, size = 0x4, scoped, tag = 'scoped memory for tpu_custom_call.1']
    #allocation7 [shape = 'u8[4096]{0}', space=vmem, size = 0x1000, scoped, tag = 'output window, operand 1, single buffered']
    %10 = vsyncpa [#allocation3], 0
    %11 = vsyncpa [#allocation6], 0
    %12 = vsyncpa [#allocation4], 0
    // Predicated region
    $region2: #{tpu_custom_call.1} parent=1 // pred_check
      _
    $region3: #{tpu_custom_call.1} parent=1 // pred_check_branch
      %14 = sbr.rel (0) target = $region5
    $region4: #{tpu_custom_call.1} parent=1 // pred_region
      %s16 = ssub.s32 128, 128
      %17 = vsyncadd [#allocation3], %s16
      %s19 = sshll.u32 [#allocation2], 4
      %s20 = int_to_ptr.vmem [resolvable:$true] %s19
      %22 = dma.hbm_to_vmem [thread:$0]  %s0, 128, %s20, [#allocation3]
    $region5: #{tpu_custom_call.1} parent=1 // pred_fallthru
      _
    // Predicated region
    $region6: #{tpu_custom_call.1} parent=1 // pred_check
      _
    $region7: #{tpu_custom_call.1} parent=1 // pred_check_branch
      %24 = sbr.rel (0) target = $region9
    $region8: #{tpu_custom_call.1} parent=1 // pred_region
      %s26 = ssub.s32 512, 512
      %27 = vsyncadd [#allocation6], %s26
      %s28 = sshll.u32 [#allocation5], 4
      %s29 = int_to_ptr.vmem [resolvable:$true] %s28
      %34 = dma.hbm_to_vmem [thread:$0]  %s1, 512, %s29, [#allocation6], 128, 128, 8
    $region9: #{tpu_custom_call.1} parent=1 // pred_fallthru
      _
    // Predicated region
    $region10: #{tpu_custom_call.1} parent=1 // pred_check
      _
    $region11: #{tpu_custom_call.1} parent=1 // pred_check_branch
      %36 = sbr.rel (0) target = $region13
    $region12: #{tpu_custom_call.1} parent=1 // pred_region
      _
    $region13: #{tpu_custom_call.1} parent=1 // pred_fallthru
      _
    // Predicated region
    $region14: #{tpu_custom_call.1} parent=1 // pred_check
      _
    $region15: #{tpu_custom_call.1} parent=1 // pred_check_branch
      %38 = sbr.rel (0) target = $region17
    $region16: #{tpu_custom_call.1} parent=1 // pred_region
      %39 = dma.done [#allocation3], 128
    $region17: #{tpu_custom_call.1} parent=1 // pred_fallthru
      _
    // Predicated region
    $region18: #{tpu_custom_call.1} parent=1 // pred_check
      _
    $region19: #{tpu_custom_call.1} parent=1 // pred_check_branch
      %41 = sbr.rel (0) target = $region21
    $region20: #{tpu_custom_call.1} parent=1 // pred_region
      %42 = dma.done [#allocation6], 512
    $region21: #{tpu_custom_call.1} parent=1 // pred_fallthru
      _
    %v43 = vld [vmem:[#allocation2] sm:$0xff]
    %v44 = vld [vmem:[#allocation5] sm:$0xff]
    %v45 = vld [vmem:[#allocation5 + $0x8] sm:$0xff]
    %v46 = vld [vmem:[#allocation5 + $0x10] sm:$0xff]
    %v47 = vld [vmem:[#allocation5 + $0x18] sm:$0xff]
    %vm48 = vcmask 261120
    %v50 = vsel %vm48, %v43, 0
    %52 = vmatprep.subr.mxu0 0.0
    %53 = vmatpush1.msra.mxu0 %v44
    %54 = vmatprep.subr.mxu0 0.0
    %55 = vmatpush1.msra.mxu0 %v45
    %56 = vmatprep.subr.mxu0 0.0
    %57 = vmatpush1.msra.mxu0 %v46
    %58 = vmatprep.subr.mxu0 0.0
    %59 = vmatpush1.msra.mxu0 %v47
    %60 = vmatprep.subr.mxu0 0.0
    %61 = vmatpush1.msra.mxu0 0.0
    %62 = vmatprep.subr.mxu0 0.0
    %63 = vmatpush1.msra.mxu0 0.0
    %64 = vmatprep.subr.mxu0 0.0
    %65 = vmatpush1.msra.mxu0 0.0
    %66 = vmatprep.subr.mxu0 0.0
    %67 = vmatpush1.msra.mxu0 0.0
    %68 = vmatprep.subr.mxu0 0.0
    %69 = vmatpush1.msra.mxu0 0.0
    %70 = vmatprep.subr.mxu0 0.0
    %71 = vmatpush1.msra.mxu0 0.0
    %72 = vmatprep.subr.mxu0 0.0
    %73 = vmatpush1.msra.mxu0 0.0
    %74 = vmatprep.subr.mxu0 0.0
    %75 = vmatpush1.msra.mxu0 0.0
    %76 = vmatprep.subr.mxu0 0.0
    %77 = vmatpush1.msra.mxu0 0.0
    %78 = vmatprep.subr.mxu0 0.0
    %79 = vmatpush1.msra.mxu0 0.0
    %80 = vmatprep.subr.mxu0 0.0
    %81 = vmatpush1.msra.mxu0 0.0
    %82 = vmatprep.subr.mxu0 0.0
    %83 = vmatpush1.msra.mxu0 0.0
    %84 = vmatprep.subr.mxu0 0.0
    %85 = vmatpush1.msra.mxu0 0.0
    %86 = vmatprep.subr.mxu0 0.0
    %87 = vmatpush1.msra.mxu0 0.0
    %88 = vmatprep.subr.mxu0 0.0
    %89 = vmatpush1.msra.mxu0 0.0
    %90 = vmatprep.subr.mxu0 0.0
    %91 = vmatpush1.msra.mxu0 0.0
    %92 = vmatprep.subr.mxu0 0.0
    %93 = vmatpush1.msra.mxu0 0.0
    %94 = vmatprep.subr.mxu0 0.0
    %95 = vmatpush1.msra.mxu0 0.0
    %96 = vmatprep.subr.mxu0 0.0
    %97 = vmatpush1.msra.mxu0 0.0
    %98 = vmatprep.subr.mxu0 0.0
    %99 = vmatpush1.msra.mxu0 0.0
    %100 = vmatprep.subr.mxu0 0.0
    %101 = vmatpush1.msra.mxu0 0.0
    %102 = vmatprep.subr.mxu0 0.0
    %103 = vmatpush1.msra.mxu0 0.0
    %104 = vmatprep.subr.mxu0 0.0
    %105 = vmatpush1.msra.mxu0 0.0
    %106 = vmatprep.subr.mxu0 0.0
    %107 = vmatpush1.msra.mxu0 0.0
    %108 = vmatprep.subr.mxu0 0.0
    %109 = vmatpush1.msra.mxu0 0.0
    %110 = vmatprep.subr.mxu0 0.0
    %111 = vmatpush1.msra.mxu0 0.0
    %112 = vmatprep.subr.mxu0 0.0
    %113 = vmatpush1.msra.mxu0 0.0
    %114 = vmatprep.subr.mxu0 0.0
    %115 = vmatpush1.msra.mxu0 0.0
    %116 = vmatprep.mubr.f32.mxu0 0.0
    %117 = vmatmul.mubr.f32.gmra.mrb[0].mxu0 %v50
    %v118 = vpop.f32.mrb[0].mxu0
    %v119 = vadd.f32 0.0, %v118
    %v120 = vpop.f32.mrb[0].mxu0
    %121 = vdwg.mxu0
    %v122 = vmul.f32 %v43, %v43
    %v123 = vsel %vm48, %v122, 0.0
    %124 = vadd.xlane.f32.xlu0 %v123
    %v125 = vpop.xlane.xlu0 %124
    %v126 = vrsqrt.pop %v125
    %v127 = vmul.f32 %v125, %v126
    %vm128 = vcmp.eq.f32.partialorder %v125, inf
    %v129 = vsel %vm128, %v125, %v127
    %vm130 = vcmp.eq.f32.partialorder %v125, 0.0
    %v131 = vand.u32 %v125, 2147483648
    %v132 = vsel %vm130, %v131, %v129
    %v133 = vld [vmem:[%s2] sm:$0x1]
    %v135 = vlaneseq
    %v136 = vshrl.u32 %v135, 7
    %v137 = vsub.s32 0, %v136
    %v138 = vrot.slane %v133, %v137
    %v140 = vmul.f32 %v132, %v138
    %v141 = vmax.f32 %v140, 1e-08
    %v142 = vrcp.pop %v141
    %v143 = vmul.f32 %v119, %v142
    %144 = vst [vmem:[#allocation7] sm:$0xff] %v143
    %vm145 = vcmask 7168
    %146 = vst.msk [vmem:[%s3] sm:$0xff] %vm145, %v132
    // Predicated region
    $region22: #{tpu_custom_call.1} parent=1 // pred_check
      _
    $region23: #{tpu_custom_call.1} parent=1 // pred_check_branch
      %148 = sbr.rel (0) target = $region25
    $region24: #{tpu_custom_call.1} parent=1 // pred_region
      _
    $region25: #{tpu_custom_call.1} parent=1 // pred_fallthru
      _
    // Predicated region
    $region26: #{tpu_custom_call.1} parent=1 // pred_check
      _
    $region27: #{tpu_custom_call.1} parent=1 // pred_check_branch
      %150 = sbr.rel (0) target = $region29
    $region28: #{tpu_custom_call.1} parent=1 // pred_region
      %s152 = ssub.s32 128, 128
      %153 = vsyncadd [#allocation4], %s152
      %s155 = sshll.u32 [#allocation7], 4
      %s156 = int_to_ptr.vmem [resolvable:$true] %s155
      %158 = dma.vmem_to_hbm [thread:$0]  %s156, 128, %s4, [#allocation4]
    $region29: #{tpu_custom_call.1} parent=1 // pred_fallthru
      _
    // Predicated region
    $region30: #{tpu_custom_call.1} parent=1 // pred_check
      _
    $region31: #{tpu_custom_call.1} parent=1 // pred_check_branch
      %160 = sbr.rel (0) target = $region33
    $region32: #{tpu_custom_call.1} parent=1 // pred_region
      _
    $region33: #{tpu_custom_call.1} parent=1 // pred_fallthru
      _
    // Predicated region
    $region34: #{tpu_custom_call.1} parent=1 // pred_check
      _
    $region35: #{tpu_custom_call.1} parent=1 // pred_check_branch
      %162 = sbr.rel (0) target = $region37
    $region36: #{tpu_custom_call.1} parent=1 // pred_region
      %163 = dma.done [#allocation4], 128
    $region37: #{tpu_custom_call.1} parent=1 // pred_fallthru
      _
    %164 = vsyncpa [#allocation3], 1
    %165 = vsyncpa [#allocation6], 1
    %166 = vsyncpa [#allocation4], 1

</llo_original>
